<compile_context>
chip_gen: v7x
topology: tpu7x:2x2x1
jax: 0.10.0
libtpu: 0.0.40
codegen_flags: <defaults>
</compile_context>

<pallas_src>
import functools

import numpy as np
import jax
import jax.numpy as jnp
from jax.experimental import pallas as pl
from jax.experimental.pallas import tpu as pltpu


# ----------------------------- small helpers (glue) -------------------------------

def _round_up(v, m):
    return (v + m - 1) // m * m


def positional_encode(x, multires):
    """NeRF get_embedder(multires): [x, sin(2^i x), cos(2^i x), ...] -> 3*(1+2*multires).
    Applied to the CONTRACTED coordinates, matching the reference forward()."""
    outs = [x]
    for i in range(multires):
        f = float(2 ** i)
        outs.append(jnp.sin(x * f))
        outs.append(jnp.cos(x * f))
    return jnp.concatenate(outs, axis=-1)


def _sample_plane(plane, u, v):
    """Level-0, clamp-boundary bilinear texture lookup (nvdiffrast dr.texture convention:
    texel centers at (i+0.5)/size).  plane: (C, H, W); u indexes W (uv.x), v indexes H (uv.y).
    The caller passes u = c[:, matMode[i][0]], v = c[:, matMode[i][1]], matching
    dr.texture(tex(1,H,W,C), uv=(c[m0], c[m1])) in the reference."""
    c, h, w = plane.shape
    px = jnp.clip(u * w - 0.5, 0.0, w - 1.0)
    py = jnp.clip(v * h - 0.5, 0.0, h - 1.0)
    x0f = jnp.floor(px)
    y0f = jnp.floor(py)
    fx = (px - x0f)[:, None]
    fy = (py - y0f)[:, None]
    x0 = x0f.astype(jnp.int32)
    y0 = y0f.astype(jnp.int32)
    x1 = jnp.minimum(x0 + 1, w - 1)
    y1 = jnp.minimum(y0 + 1, h - 1)
    p = jnp.transpose(plane, (1, 2, 0))            # (H, W, C)
    c00 = p[y0, x0]
    c01 = p[y0, x1]
    c10 = p[y1, x0]
    c11 = p[y1, x1]
    top = c00 * (1.0 - fx) + c01 * fx
    bot = c10 * (1.0 - fx) + c11 * fx
    return top * (1.0 - fy) + bot * fy             # (N, C)


def _sample_line(line, t):
    """Level-0, clamp-boundary linear lookup along the line axis.  line: (C, L)."""
    c, l = line.shape
    pz = jnp.clip(t * l - 0.5, 0.0, l - 1.0)
    z0f = jnp.floor(pz)
    fz = (pz - z0f)[:, None]
    z0 = z0f.astype(jnp.int32)
    z1 = jnp.minimum(z0 + 1, l - 1)
    lt = jnp.transpose(line, (1, 0))               # (L, C)
    return lt[z0] * (1.0 - fz) + lt[z1] * fz       # (N, C)


# -------------------- Pallas kernel: fused sdf_mat MLP head ------------------------

def _sdf_head_kernel(compute_dtype, x_ref, w0_ref, b0_ref, w1_ref, b1_ref, out_ref):
    # single merged first Linear: x = [sigma_feature | pos_enc] already concatenated,
    # bf16 operands, f32 MXU accumulation
    h = jnp.dot(x_ref[...], w0_ref[...], preferred_element_type=jnp.float32)
    h = h + b0_ref[...]
    # torch.nn.Softplus(beta=100): (1/beta)*log(1 + exp(beta*x)); identity when beta*x > 20
    hb = h * 100.0
    sp = jnp.log1p(jnp.exp(jnp.minimum(hb, 20.0))) * 0.01
    h = jnp.where(hb > 20.0, h, sp)
    out = jnp.dot(h.astype(compute_dtype), w1_ref[...], preferred_element_type=jnp.float32)
    out_ref[...] = out + b1_ref[...]


def _pick_block_rows(n, block_rows_max=2048, min_steps=2):
    """Largest row tile <= block_rows_max (multiple of 8) such that the grid has at
    least `min_steps` steps (keeps both v7x TensorCores busy); tiny N collapses to 8."""
    rows = _round_up(max(n, 8), 8)
    br = max(8, min(block_rows_max, _round_up(pl.cdiv(rows, min_steps), 8)))
    return br


def sdf_head_forward(sigma_feature, xyz_enc, w0, b0, w1, b1, *,
                     compute_dtype=jnp.bfloat16, block_rows_max=2048):
    """sigma_feature: (N, F), xyz_enc: (N, E), w0: (F+E, H), b0: (H,), w1: (H, O), b1: (O,).
    Returns (N, O) float32."""
    n, feat_ch = sigma_feature.shape
    enc_ch = xyz_enc.shape[1]
    hid = w0.shape[1]
    out_ch = w1.shape[1]
    in_ch = feat_ch + enc_ch

    in_pad = _round_up(in_ch, 128)     # 129 -> 256: one K=256 dot on the first layer
    hpad = _round_up(hid, 128)
    opad = _round_up(out_ch, 128)

    block_rows = _pick_block_rows(n, block_rows_max)
    n_pad = _round_up(_round_up(max(n, 8), 8), block_rows)
    grid = n_pad // block_rows

    # single bf16 padded activation slab (one pass; half the bytes of the old f32 slabs)
    xp = jnp.zeros((n_pad, in_pad), compute_dtype)
    xp = xp.at[:n, :feat_ch].set(sigma_feature.astype(compute_dtype))
    xp = xp.at[:n, feat_ch:in_ch].set(xyz_enc.astype(compute_dtype))

    # weights resident in VMEM at compute dtype (bf16 -> half DMA bytes, MXU-native)
    w0p = jnp.zeros((in_pad, hpad), compute_dtype).at[:in_ch, :hid].set(
        w0.astype(compute_dtype))
    b0p = jnp.zeros((1, hpad), jnp.float32).at[0, :hid].set(b0)
    w1p = jnp.zeros((hpad, opad), compute_dtype).at[:hid, :out_ch].set(
        w1.astype(compute_dtype))
    b1p = jnp.zeros((1, opad), jnp.float32).at[0, :out_ch].set(b1)

    in_specs = [
        pl.BlockSpec((block_rows, in_pad), lambda i: (i, 0)),
        pl.BlockSpec((in_pad, hpad), lambda i: (0, 0)),
        pl.BlockSpec((1, hpad), lambda i: (0, 0)),
        pl.BlockSpec((hpad, opad), lambda i: (0, 0)),
        pl.BlockSpec((1, opad), lambda i: (0, 0)),
    ]

    out = pl.pallas_call(
        functools.partial(_sdf_head_kernel, compute_dtype),
        out_shape=jax.ShapeDtypeStruct((n_pad, opad), jnp.float32),
        grid=(grid,),
        in_specs=in_specs,
        out_specs=pl.BlockSpec((block_rows, opad), lambda i: (i, 0)),
        compiler_params=pltpu.CompilerParams(
            dimension_semantics=("parallel",),
            vmem_limit_bytes=32 * 1024 * 1024),
    )(xp, w0p, b0p, w1p, b1p)
    return out[:n, :out_ch]


# --------------------------------- the network -------------------------------------

class TensoSDFPallas:
    """JAX/Pallas port of TensoSDF.forward (VM-decomposed SDF + appearance feature field)."""

    def __init__(self, gridSize, aabb, key, sdf_n_comp=36, sdf_dim=256, app_dim=128,
                 init_n_levels=3, sdf_multires=3, compute_dtype=jnp.bfloat16):
        self.matMode = [[0, 1], [0, 2], [1, 2]]
        self.vecMode = [2, 1, 0]
        self.nplane = 3
        self.init_radius = 0.2
        self.gridSize = np.asarray(gridSize, np.int32)
        self.aabb = jnp.asarray(aabb, jnp.float32)          # (2, 3)
        self.n_levels = init_n_levels
        self.sdf_n_comp = sdf_n_comp
        self.sdf_dim = sdf_dim
        self.app_dim = app_dim
        self.sdf_multires = sdf_multires
        self.compute_dtype = compute_dtype

        self.feat_ch = sdf_n_comp * self.nplane             # 108 (sdf_feat_multires = 0)
        self.enc_ch = 3 * (1 + 2 * sdf_multires)            # 21  (get_embedder(3, 3))

        # --- circle_init_one_svd ---
        planes, lines = [], []
        for i in range(self.nplane):
            h = int(self.gridSize[self.matMode[i][0]])
            w = int(self.gridSize[self.matMode[i][1]])
            l = int(self.gridSize[self.vecMode[i]])
            planes.append(self._circle_init(h, w, sdf_n_comp, self.init_radius))
            lines.append(jnp.full((sdf_n_comp, l),
                                  1.0 / (sdf_n_comp * self.nplane), jnp.float32))

        # --- sdf_mat: Linear(F+E, sdf_dim), Softplus(beta=100), Linear(sdf_dim, 1+app_dim) ---
        k0, k1 = jax.random.split(key)
        w0 = jax.random.normal(k0, (self.feat_ch + self.enc_ch, sdf_dim), jnp.float32) \
            * (np.sqrt(2.0) / np.sqrt(sdf_dim))
        b0 = jnp.zeros((sdf_dim,), jnp.float32)
        w1 = (np.sqrt(np.pi) / np.sqrt(sdf_dim)
              + 1e-4 * jax.random.normal(k1, (sdf_dim, 1 + app_dim), jnp.float32))
        b1 = jnp.full((1 + app_dim,), -self.init_radius, jnp.float32)

        self.params = {'planes': planes, 'lines': lines,
                       'w0': w0, 'b0': b0, 'w1': w1, 'b1': b1}

    @staticmethod
    def _circle_init(h, w, n_comp, init_radius):
        x = np.linspace(-1.0, 1.0, h)
        y = np.linspace(-1.0, 1.0, w)
        xx, yy = np.meshgrid(x, y, indexing='ij')
        sdf = np.sqrt(xx * xx + yy * yy) - init_radius          # (H, W)
        return jnp.asarray(np.broadcast_to(sdf[None], (n_comp, h, w)).copy(), jnp.float32)

    def _contraction(self, xyz):
        # TODO(synk): the repo's `contraction` (not in the spec) may apply an unbounded-scene
        # contraction for points outside the aabb; here points are box-normalized to [0,1]
        # (dr.texture uv convention) and clamped.
        c = (xyz - self.aabb[0]) / (self.aabb[1] - self.aabb[0])
        return jnp.clip(c, 0.0, 1.0)

    # ---------------------------- forward -----------------------------------------
    def forward(self, params, xyz_sampled, level_vol=None):
        xyz = xyz_sampled.reshape(-1, 3)
        c = self._contraction(xyz)                                   # (N, 3)

        # TODO(synk): dr.texture's mip_level_bias (trilinear mip filtering over n_levels)
        # is not ported; level-0 lookup is used (level_vol defaults to zeros in the reference).
        # TODO(synk): for large N, fold these gathers + the plane*line product into a Pallas
        # kernel (planes/lines fit in VMEM) to avoid the (N, 108) HBM round-trip.
        plane_feats, line_feats = [], []
        for i in range(self.nplane):
            m0, m1 = self.matMode[i]
            plane_feats.append(_sample_plane(params['planes'][i], c[:, m0], c[:, m1]))
            line_feats.append(_sample_line(params['lines'][i], c[:, self.vecMode[i]]))
        sigma_feature = (jnp.concatenate(plane_feats, -1)
                         * jnp.concatenate(line_feats, -1))          # (N, 3*n_comp)

        # positional encoding of the contracted coords (matches the reference embed_fn input)
        xyz_enc = positional_encode(c, self.sdf_multires)            # (N, 21)

        return sdf_head_forward(sigma_feature, xyz_enc,
                                params['w0'], params['b0'],
                                params['w1'], params['b1'],
                                compute_dtype=self.compute_dtype)    # (N, 1 + app_dim)

    def sdf(self, params, xyz_sampled, level_vol=None):
        return self.forward(params, xyz_sampled, level_vol)[..., :1]

    def sdf_hidden_appearance(self, params, xyz_sampled, level_vol=None):
        return self.forward(params, xyz_sampled, level_vol)[..., 1:]


# ------------------------------------- main -----------------------------------------

if __name__ == "__main__":
    key = jax.random.PRNGKey(0)
    k_param, k_pts = jax.random.split(key)

    gridSize = (32, 32, 32)
    aabb = np.asarray([[-1.0, -1.0, -1.0], [1.0, 1.0, 1.0]], np.float32)
    net = TensoSDFPallas(gridSize, aabb, k_param,
                         sdf_n_comp=36, sdf_dim=256, app_dim=128,
                         init_n_levels=3, sdf_multires=3)

    pn = 16
    pts = jax.random.uniform(k_pts, (pn, 3), jnp.float32, -0.9, 0.9)

    fwd = jax.jit(lambda p, x: net.forward(p, x))
    out_feats = fwd(net.params, pts)
    jax.block_until_ready(out_feats)

    assert out_feats.shape == (pn, 1 + net.app_dim)
    sdf_vals = out_feats[:, :1]
    app_feats = out_feats[:, 1:]
    assert sdf_vals.shape == (pn, 1)
    assert app_feats.shape == (pn, net.app_dim)
    assert bool(jnp.all(jnp.isfinite(out_feats)))
    print("KERNEL_OK")
</pallas_src>

<mosaic_0001>
module attributes {stable_mosaic.version = 11 : i64} {
  func.func @_sdf_head_kernel(%arg0: i32, %arg1: memref<8x256xbf16, #tpu.memory_space<vmem>>, %arg2: memref<256x256xbf16, #tpu.memory_space<vmem>>, %arg3: memref<1x256xf32, #tpu.memory_space<vmem>>, %arg4: memref<256x256xbf16, #tpu.memory_space<vmem>>, %arg5: memref<1x256xf32, #tpu.memory_space<vmem>>, %arg6: memref<8x256xf32, #tpu.memory_space<vmem>>) attributes {dimension_semantics = [#tpu.dimension_semantics<parallel>], iteration_bounds = array<i64: 2>, scalar_prefetch = 0 : i64, scratch_operands = 0 : i64, tpu.core_type = #tpu.core_type<tc>, window_params = [{transform_indices = @transform_0, window_bounds = array<i64: 8, 256>}, {pipeline_mode = #tpu.pipeline_mode<synchronous>, transform_indices = @transform_1, window_bounds = array<i64: 256, 256>}, {pipeline_mode = #tpu.pipeline_mode<synchronous>, transform_indices = @transform_2, window_bounds = array<i64: 1, 256>}, {pipeline_mode = #tpu.pipeline_mode<synchronous>, transform_indices = @transform_3, window_bounds = array<i64: 256, 256>}, {pipeline_mode = #tpu.pipeline_mode<synchronous>, transform_indices = @transform_4, window_bounds = array<i64: 1, 256>}, {transform_indices = @transform_5, window_bounds = array<i64: 8, 256>}]} {
    %c0 = arith.constant 0 : index
    %c0_0 = arith.constant 0 : index
    %0 = vector.load %arg1[%c0, %c0_0] : memref<8x256xbf16, #tpu.memory_space<vmem>>, vector<8x256xbf16>
    %c0_1 = arith.constant 0 : index
    %c0_2 = arith.constant 0 : index
    %1 = vector.load %arg2[%c0_1, %c0_2] : memref<256x256xbf16, #tpu.memory_space<vmem>>, vector<256x256xbf16>
    %cst = arith.constant dense<0.000000e+00> : vector<8x256xf32>
    %2 = tpu.matmul %0, %1, %cst {dimension_numbers = #tpu.dot_dimension_numbers<[1], [0], [0], [1], [0, 0, 1, 1], [], []>} : vector<8x256xbf16>, vector<256x256xbf16>, vector<8x256xf32> -> vector<8x256xf32>
    %c0_3 = arith.constant 0 : index
    %c0_4 = arith.constant 0 : index
    %3 = vector.load %arg3[%c0_3, %c0_4] : memref<1x256xf32, #tpu.memory_space<vmem>>, vector<1x256xf32>
    %4 = vector.broadcast %3 : vector<1x256xf32> to vector<8x256xf32>
    %5 = arith.addf %2, %4 : vector<8x256xf32>
    %cst_5 = arith.constant 1.000000e+02 : f32
    %6 = vector.broadcast %cst_5 : f32 to vector<8x256xf32>
    %7 = arith.mulf %5, %6 : vector<8x256xf32>
    %cst_6 = arith.constant 2.000000e+01 : f32
    %8 = vector.broadcast %cst_6 : f32 to vector<8x256xf32>
    %9 = arith.minimumf %7, %8 : vector<8x256xf32>
    %10 = math.exp %9 : vector<8x256xf32>
    %11 = math.log1p %10 : vector<8x256xf32>
    %cst_7 = arith.constant 0.00999999977 : f32
    %12 = vector.broadcast %cst_7 : f32 to vector<8x256xf32>
    %13 = arith.mulf %11, %12 : vector<8x256xf32>
    %cst_8 = arith.constant 2.000000e+01 : f32
    %14 = vector.broadcast %cst_8 : f32 to vector<8x256xf32>
    %15 = arith.cmpf ogt, %7, %14 : vector<8x256xf32>
    %16 = arith.select %15, %5, %13 : vector<8x256xi1>, vector<8x256xf32>
    %17 = arith.truncf %16 : vector<8x256xf32> to vector<8x256xbf16>
    %c0_9 = arith.constant 0 : index
    %c0_10 = arith.constant 0 : index
    %18 = vector.load %arg4[%c0_9, %c0_10] : memref<256x256xbf16, #tpu.memory_space<vmem>>, vector<256x256xbf16>
    %cst_11 = arith.constant dense<0.000000e+00> : vector<8x256xf32>
    %19 = tpu.matmul %17, %18, %cst_11 {dimension_numbers = #tpu.dot_dimension_numbers<[1], [0], [0], [1], [0, 0, 1, 1], [], []>} : vector<8x256xbf16>, vector<256x256xbf16>, vector<8x256xf32> -> vector<8x256xf32>
    %c0_12 = arith.constant 0 : index
    %c0_13 = arith.constant 0 : index
    %20 = vector.load %arg5[%c0_12, %c0_13] : memref<1x256xf32, #tpu.memory_space<vmem>>, vector<1x256xf32>
    %21 = vector.broadcast %20 : vector<1x256xf32> to vector<8x256xf32>
    %22 = arith.addf %19, %21 : vector<8x256xf32>
    %c0_14 = arith.constant 0 : index
    %c0_15 = arith.constant 0 : index
    %23 = vector.load %arg6[%c0_14, %c0_15] : memref<8x256xf32, #tpu.memory_space<vmem>>, vector<8x256xf32>
    tpu.vector_store %arg6[%c0_14, %c0_15], %22 {strides = array<i32>} : memref<8x256xf32, #tpu.memory_space<vmem>>, vector<8x256xf32>,
    return
  }
  func.func @transform_0(%arg0: i32) -> (i32, i32) {
    %c0_i32 = arith.constant 0 : i32
    %c0_i32_0 = arith.constant 0 : i32
    return %arg0, %c0_i32 : i32, i32
  }
  func.func @transform_1(%arg0: i32) -> (i32, i32) {
    %c0_i32 = arith.constant 0 : i32
    %c0_i32_0 = arith.constant 0 : i32
    %c0_i32_1 = arith.constant 0 : i32
    return %c0_i32, %c0_i32_0 : i32, i32
  }
  func.func @transform_2(%arg0: i32) -> (i32, i32) {
    %c0_i32 = arith.constant 0 : i32
    %c0_i32_0 = arith.constant 0 : i32
    %c0_i32_1 = arith.constant 0 : i32
    return %c0_i32, %c0_i32_0 : i32, i32
  }
  func.func @transform_3(%arg0: i32) -> (i32, i32) {
    %c0_i32 = arith.constant 0 : i32
    %c0_i32_0 = arith.constant 0 : i32
    %c0_i32_1 = arith.constant 0 : i32
    return %c0_i32, %c0_i32_0 : i32, i32
  }
  func.func @transform_4(%arg0: i32) -> (i32, i32) {
    %c0_i32 = arith.constant 0 : i32
    %c0_i32_0 = arith.constant 0 : i32
    %c0_i32_1 = arith.constant 0 : i32
    return %c0_i32, %c0_i32_0 : i32, i32
  }
  func.func @transform_5(%arg0: i32) -> (i32, i32) {
    %c0_i32 = arith.constant 0 : i32
    %c0_i32_0 = arith.constant 0 : i32
    return %arg0, %c0_i32 : i32, i32
  }
}

</mosaic_0001>

<llo_original>
// kernel: _lambda_.1
$region0: #{_lambda_.1}
  #allocation0 [shape = 'u32[]', space=smem, size = 0x4, offset = 0x4, fixed_abs, tag = 'smem constant byte address 0x4 - core index']
  #allocation1 [shape = 'u32[144,128]{1,0:T(1,128)}', space=vmem, size = 0x12000, scoped, tag = 'internal scratch']
  %s0 = inlined_call_operand.vmem [shape: bf16[16,256], index: 0, kind: input, shape index: {}]
  %s1 = inlined_call_operand.vmem [shape: bf16[256,256], index: 1, kind: input, shape index: {}]
  %s2 = inlined_call_operand.vmem [shape: f32[1,256], index: 2, kind: input, shape index: {}]
  %s3 = inlined_call_operand.vmem [shape: bf16[256,256], index: 3, kind: input, shape index: {}]
  %s4 = inlined_call_operand.vmem [shape: f32[1,256], index: 4, kind: input, shape index: {}]
  %s5 = inlined_call_operand.hbm [shape: f32[16,256], index: 5, kind: output, shape index: {}]
  %s6 = sld [smem:[#allocation0]]
  $region53: #{_lambda_.1} parent=0
    _
  %s8 = ssub.s32 1, %s6
  %s9 = scalar_select 0, %s8, %s6
  $region1: #{_lambda_.1} parent=0
    #allocation2 [shape = 'u8[16384]{0}', space=vmem, size = 0x4000, scoped, tag = 'output window, operand 0']
    #allocation3 [shape = 's32[2]{0}', space=sflag, size = 0x8, scoped, tag = 'scoped memory for _lambda_.1']
    %10 = vsyncpa [#allocation3], 0
    %s11 = scalar_lea.sflag [#allocation3], 1
    %12 = vsyncpa %s11, 0
    loop: start=0, step=1, limit=4
    $region2: #{_lambda_.1} parent=1 // loop_pre_header
      _
    $region3: #{_lambda_.1} parent=1 // loop_header
      %s14 = sphi 0, %s18
      %p15 = scmp.ge.s32.totalorder %s14, 4
      %s24 = sphi 0, %s26
      %s27 = sphi 0, %s24
      %s28 = sphi 0, %s27
      %s44 = sphi 0, %s28
      %s48 = sphi 0, %s48
      %s50 = sphi 0, %s48
      %s51 = sphi 0, %s50
      %s65 = sphi 0, %s51
      %s69 = sphi 0, %s69
      %s71 = sphi 0, %s69
      %s72 = sphi 0, %s71
      %s86 = sphi 0, %s72
      %s90 = sphi 0, %s90
      %s92 = sphi 0, %s90
      %s93 = sphi 0, %s92
      %s107 = sphi 0, %s93
      %s111 = sphi 0, %s111
      %s113 = sphi 0, %s111
      %s114 = sphi 0, %s113
      %s128 = sphi 0, %s114
      %s134 = sphi 0, %s136
      %s137 = sphi 0, %s134
      %s138 = sphi 0, %s137
      %s154 = sphi 0, %s138
    $region4: #{_lambda_.1} parent=1 // loop_header_branch
      %17 = sbr.rel (%p15) target = $region8
    $region5: #{_lambda_.1} parent=1 // loop_body
      %s19 = ssub.s32 %s14, 1
      %s20 = ssub.s32 %s14, 2
      %s21 = sadd.s32 %s14, 1
      %s22 = ssub.s32 %s14, %s21
      %p23 = scmp.eq.s32.totalorder %s22, 0
      %s25 = sadd.s32 %s24, 1
      %s26 = scalar_select %p23, %s24, %s25
      %p29 = pneg %p23
      %p30 = scmp.eq.s32.totalorder %s14, 1
      %p31 = por %p29, %p30
      %p32 = scmp.ne.s32.totalorder %s24, %s27
      %p33 = scmp.eq.s32.totalorder %s14, 0
      %p34 = por %p32, %p33
      %p35 = scmp.ne.s32.totalorder %s24, %s27
      %p36 = scmp.eq.s32.totalorder %s19, 1
      %p37 = por %p35, %p36
      %p38 = scmp.ne.s32.totalorder %s27, %s28
      %p39 = scmp.eq.s32.totalorder %s19, 0
      %p40 = por %p38, %p39
      %p41 = scmp.ne.s32.totalorder %s27, %s28
      %p42 = scmp.eq.s32.totalorder %s20, 1
      %p43 = por %p41, %p42
      %p45 = scmp.ne.s32.totalorder %s28, %s44
      %p46 = scmp.eq.s32.totalorder %s20, 0
      %p47 = por %p45, %p46
      %s49 = sadd.s32 %s48, 1
      %p52 = scmp.eq.s32.totalorder %s14, 1
      %p53 = scmp.ne.s32.totalorder %s48, %s50
      %p54 = scmp.eq.s32.totalorder %s14, 0
      %p55 = por %p53, %p54
      %p56 = scmp.ne.s32.totalorder %s48, %s50
      %p57 = scmp.eq.s32.totalorder %s19, 1
      %p58 = por %p56, %p57
      %p59 = scmp.ne.s32.totalorder %s50, %s51
      %p60 = scmp.eq.s32.totalorder %s19, 0
      %p61 = por %p59, %p60
      %p62 = scmp.ne.s32.totalorder %s50, %s51
      %p63 = scmp.eq.s32.totalorder %s20, 1
      %p64 = por %p62, %p63
      %p66 = scmp.ne.s32.totalorder %s51, %s65
      %p67 = scmp.eq.s32.totalorder %s20, 0
      %p68 = por %p66, %p67
      %s70 = sadd.s32 %s69, 1
      %p73 = scmp.eq.s32.totalorder %s14, 1
      %p74 = scmp.ne.s32.totalorder %s69, %s71
      %p75 = scmp.eq.s32.totalorder %s14, 0
      %p76 = por %p74, %p75
      %p77 = scmp.ne.s32.totalorder %s69, %s71
      %p78 = scmp.eq.s32.totalorder %s19, 1
      %p79 = por %p77, %p78
      %p80 = scmp.ne.s32.totalorder %s71, %s72
      %p81 = scmp.eq.s32.totalorder %s19, 0
      %p82 = por %p80, %p81
      %p83 = scmp.ne.s32.totalorder %s71, %s72
      %p84 = scmp.eq.s32.totalorder %s20, 1
      %p85 = por %p83, %p84
      %p87 = scmp.ne.s32.totalorder %s72, %s86
      %p88 = scmp.eq.s32.totalorder %s20, 0
      %p89 = por %p87, %p88
      %s91 = sadd.s32 %s90, 1
      %p94 = scmp.eq.s32.totalorder %s14, 1
      %p95 = scmp.ne.s32.totalorder %s90, %s92
      %p96 = scmp.eq.s32.totalorder %s14, 0
      %p97 = por %p95, %p96
      %p98 = scmp.ne.s32.totalorder %s90, %s92
      %p99 = scmp.eq.s32.totalorder %s19, 1
      %p100 = por %p98, %p99
      %p101 = scmp.ne.s32.totalorder %s92, %s93
      %p102 = scmp.eq.s32.totalorder %s19, 0
      %p103 = por %p101, %p102
      %p104 = scmp.ne.s32.totalorder %s92, %s93
      %p105 = scmp.eq.s32.totalorder %s20, 1
      %p106 = por %p104, %p105
      %p108 = scmp.ne.s32.totalorder %s93, %s107
      %p109 = scmp.eq.s32.totalorder %s20, 0
      %p110 = por %p108, %p109
      %s112 = sadd.s32 %s111, 1
      %p115 = scmp.eq.s32.totalorder %s14, 1
      %p116 = scmp.ne.s32.totalorder %s111, %s113
      %p117 = scmp.eq.s32.totalorder %s14, 0
      %p118 = por %p116, %p117
      %p119 = scmp.ne.s32.totalorder %s111, %s113
      %p120 = scmp.eq.s32.totalorder %s19, 1
      %p121 = por %p119, %p120
      %p122 = scmp.ne.s32.totalorder %s113, %s114
      %p123 = scmp.eq.s32.totalorder %s19, 0
      %p124 = por %p122, %p123
      %p125 = scmp.ne.s32.totalorder %s113, %s114
      %p126 = scmp.eq.s32.totalorder %s20, 1
      %p127 = por %p125, %p126
      %p129 = scmp.ne.s32.totalorder %s114, %s128
      %p130 = scmp.eq.s32.totalorder %s20, 0
      %p131 = por %p129, %p130
      %s132 = ssub.s32 %s14, %s21
      %p133 = scmp.eq.s32.totalorder %s132, 0
      %s135 = sadd.s32 %s134, 1
      %s136 = scalar_select %p133, %s134, %s135
      %p139 = pneg %p133
      %p140 = scmp.eq.s32.totalorder %s14, 1
      %p141 = por %p139, %p140
      %p142 = scmp.ne.s32.totalorder %s134, %s137
      %p143 = scmp.eq.s32.totalorder %s14, 0
      %p144 = por %p142, %p143
      %p145 = scmp.ne.s32.totalorder %s134, %s137
      %p146 = scmp.eq.s32.totalorder %s19, 1
      %p147 = por %p145, %p146
      %p148 = scmp.ne.s32.totalorder %s137, %s138
      %p149 = scmp.eq.s32.totalorder %s19, 0
      %p150 = por %p148, %p149
      %p151 = scmp.ne.s32.totalorder %s137, %s138
      %p152 = scmp.eq.s32.totalorder %s20, 1
      %p153 = por %p151, %p152
      %p155 = scmp.ne.s32.totalorder %s138, %s154
      %p156 = scmp.eq.s32.totalorder %s20, 0
      %p157 = por %p155, %p156
      %p158 = scmp.le.s32.totalorder 1, %s14
      %p159 = scmp.lt.s32.totalorder %s14, 3
      %p160 = pnand %p158, %p159
      %p161 = pneg %p160
      // Predicated region
      $region9: #{_lambda_.1} parent=5 // pred_check
        _
      $region10: #{_lambda_.1} parent=5 // pred_check_branch
        %163 = sbr.rel (%p160) target = $region12
      $region11: #{_lambda_.1} parent=5 // pred_region
        %s164 = ssub.s32 %s14, 1
        // Predicated region
        $region13: #{_lambda_.1} parent=11 // pred_check
          %p165 = pneg %p61
        $region14: #{_lambda_.1} parent=11 // pred_check_branch
          %167 = sbr.rel (%p165) target = $region16
        $region15: #{_lambda_.1} parent=11 // pred_region
          _
        $region16: #{_lambda_.1} parent=11 // pred_fallthru
          _
        // Predicated region
        $region17: #{_lambda_.1} parent=11 // pred_check
          %p168 = pneg %p82
        $region18: #{_lambda_.1} parent=11 // pred_check_branch
          %170 = sbr.rel (%p168) target = $region20
        $region19: #{_lambda_.1} parent=11 // pred_region
          _
        $region20: #{_lambda_.1} parent=11 // pred_fallthru
          _
        // Predicated region
        $region21: #{_lambda_.1} parent=11 // pred_check
          %p171 = pneg %p103
        $region22: #{_lambda_.1} parent=11 // pred_check_branch
          %173 = sbr.rel (%p171) target = $region24
        $region23: #{_lambda_.1} parent=11 // pred_region
          _
        $region24: #{_lambda_.1} parent=11 // pred_fallthru
          _
        // Predicated region
        $region25: #{_lambda_.1} parent=11 // pred_check
          %p174 = pneg %p124
        $region26: #{_lambda_.1} parent=11 // pred_check_branch
          %176 = sbr.rel (%p174) target = $region28
        $region27: #{_lambda_.1} parent=11 // pred_region
          _
        $region28: #{_lambda_.1} parent=11 // pred_fallthru
          _
      $region12: #{_lambda_.1} parent=5 // pred_fallthru
        _
      %p177 = scmp.lt.s32.totalorder %s14, 2
      // Predicated region
      $region29: #{_lambda_.1} parent=5 // pred_check
        %p178 = pneg %p177
      $region30: #{_lambda_.1} parent=5 // pred_check_branch
        %180 = sbr.rel (%p178) target = $region32
      $region31: #{_lambda_.1} parent=5 // pred_region
        // Predicated region
        $region33: #{_lambda_.1} parent=31 // pred_check
          %p181 = pneg %p34
        $region34: #{_lambda_.1} parent=31 // pred_check_branch
          %183 = sbr.rel (%p181) target = $region36
        $region35: #{_lambda_.1} parent=31 // pred_region
          %p184 = scmp.lt.s32.totalorder %s14, 1
          %s185 = scalar_select %p184, %s14, 1
          %s186 = smul.addr %s185, 2
          %s187 = smul.addr %s186, 4
          %s188 = scalar_lea.vmem %s0, %s187
        $region36: #{_lambda_.1} parent=31 // pred_fallthru
          _
      $region32: #{_lambda_.1} parent=5 // pred_fallthru
        _
      %p189 = scmp.le.s32.totalorder 1, %s14
      %p190 = scmp.lt.s32.totalorder %s14, 3
      %p191 = pnand %p189, %p190
      %p192 = pneg %p191
      // Predicated region
      $region37: #{_lambda_.1} parent=5 // pred_check
        _
      $region38: #{_lambda_.1} parent=5 // pred_check_branch
        %194 = sbr.rel (%p191) target = $region40
      $region39: #{_lambda_.1} parent=5 // pred_region
        %s195 = ssub.s32 %s14, 1
        %p196 = scmp.lt.s32.totalorder %s19, 1
        %s197 = scalar_select %p196, %s19, 1
        %s198 = smul.addr %s197, 2
        %s199 = smul.addr %s198, 4
        %s200 = scalar_lea.vmem %s0, %s199
        %p201 = pneg %p40
        %p202 = pneg %p37
        %p203 = pneg %p61
        %p204 = pneg %p58
        %p205 = pneg %p82
        %p206 = pneg %p79
        %p207 = pneg %p103
        %p208 = pneg %p100
        %p209 = pneg %p124
        %p210 = pneg %p121
        %p211 = pneg %p150
        %p212 = pneg %p147
        %s213 = sand.u32 %s137, 1
        %s214 = scalar_lea.sflag [#allocation3], %s213
        %s215 = sand.u32 %s137, 1
        %s216 = smul.addr %s215, 16
        %s217 = scalar_lea.vmem [#allocation2], %s216
        %p218 = scmp.lt.s32.totalorder %s19, 1
        %s219 = scalar_select %p218, %s19, 1
        %s220 = smul.addr %s219, 2
        %s221 = smul.addr %s220, 4
        %s222 = scalar_lea.vmem %s0, %s221
        %v223 = vld [vmem:[%s222] sm:$0xff]
        %v224 = vld [vmem:[%s1] sm:$0xff]
        %v225 = vld [vmem:[%s1 + $0x8] sm:$0xff]
        %v226 = vld [vmem:[%s1 + $0x10] sm:$0xff]
        %v227 = vld [vmem:[%s1 + $0x18] sm:$0xff]
        %v228 = vld [vmem:[%s1 + $0x20] sm:$0xff]
        %v229 = vld [vmem:[%s1 + $0x28] sm:$0xff]
        %v230 = vld [vmem:[%s1 + $0x30] sm:$0xff]
        %v231 = vld [vmem:[%s1 + $0x38] sm:$0xff]
        %v232 = vld [vmem:[%s1 + $0x40] sm:$0xff]
        %v233 = vld [vmem:[%s1 + $0x48] sm:$0xff]
        %v234 = vld [vmem:[%s1 + $0x50] sm:$0xff]
        %v235 = vld [vmem:[%s1 + $0x58] sm:$0xff]
        %v236 = vld [vmem:[%s1 + $0x60] sm:$0xff]
        %v237 = vld [vmem:[%s1 + $0x68] sm:$0xff]
        %v238 = vld [vmem:[%s1 + $0x70] sm:$0xff]
        %v239 = vld [vmem:[%s1 + $0x78] sm:$0xff]
        %v240 = vld [vmem:[%s1 + $0x80] sm:$0xff]
        %v241 = vld [vmem:[%s1 + $0x88] sm:$0xff]
        %v242 = vld [vmem:[%s1 + $0x90] sm:$0xff]
        %v243 = vld [vmem:[%s1 + $0x98] sm:$0xff]
        %v244 = vld [vmem:[%s1 + $0xa0] sm:$0xff]
        %v245 = vld [vmem:[%s1 + $0xa8] sm:$0xff]
        %v246 = vld [vmem:[%s1 + $0xb0] sm:$0xff]
        %v247 = vld [vmem:[%s1 + $0xb8] sm:$0xff]
        %v248 = vld [vmem:[%s1 + $0xc0] sm:$0xff]
        %v249 = vld [vmem:[%s1 + $0xc8] sm:$0xff]
        %v250 = vld [vmem:[%s1 + $0xd0] sm:$0xff]
        %v251 = vld [vmem:[%s1 + $0xd8] sm:$0xff]
        %v252 = vld [vmem:[%s1 + $0xe0] sm:$0xff]
        %v253 = vld [vmem:[%s1 + $0xe8] sm:$0xff]
        %v254 = vld [vmem:[%s1 + $0xf0] sm:$0xff]
        %v255 = vld [vmem:[%s1 + $0xf8] sm:$0xff]
        %v256 = vld [vmem:[%s2] sm:$0x3]
        %v258 = vlaneseq
        %v259 = vshrl.u32 %v258, 7
        %v260 = vsub.s32 0, %v259
        %v261 = vrot.slane %v256, %v260
        %v262 = vlaneseq
        %v263 = vshrl.u32 %v262, 7
        %v264 = vsub.s32 1, %v263
        %v265 = vrot.slane %v256, %v264
        %v269 = vunpack.c.l.b16 %v223
        %v270 = vunpack.c.h.b16 %v223
        %v271 = vpack.c.b16 %v269, %v269
        %v272 = vpack.c.b16 %v270, %v270
        %v307 = vunpack.c.l.b16 %v224
        %v308 = vunpack.c.h.b16 %v224
        %v309 = vunpack.c.l.b16 %v225
        %v310 = vunpack.c.h.b16 %v225
        %v311 = vunpack.c.l.b16 %v226
        %v312 = vunpack.c.h.b16 %v226
        %v313 = vunpack.c.l.b16 %v227
        %v314 = vunpack.c.h.b16 %v227
        %v315 = vunpack.c.l.b16 %v228
        %v316 = vunpack.c.h.b16 %v228
        %v317 = vunpack.c.l.b16 %v229
        %v318 = vunpack.c.h.b16 %v229
        %v319 = vunpack.c.l.b16 %v230
        %v320 = vunpack.c.h.b16 %v230
        %v321 = vunpack.c.l.b16 %v231
        %v322 = vunpack.c.h.b16 %v231
        %v323 = vunpack.c.l.b16 %v232
        %v324 = vunpack.c.h.b16 %v232
        %v325 = vunpack.c.l.b16 %v233
        %v326 = vunpack.c.h.b16 %v233
        %v327 = vunpack.c.l.b16 %v234
        %v328 = vunpack.c.h.b16 %v234
        %v329 = vunpack.c.l.b16 %v235
        %v330 = vunpack.c.h.b16 %v235
        %v331 = vunpack.c.l.b16 %v236
        %v332 = vunpack.c.h.b16 %v236
        %v333 = vunpack.c.l.b16 %v237
        %v334 = vunpack.c.h.b16 %v237
        %v335 = vunpack.c.l.b16 %v238
        %v336 = vunpack.c.h.b16 %v238
        %v337 = vunpack.c.l.b16 %v239
        %v338 = vunpack.c.h.b16 %v239
        %v339 = vunpack.c.l.b16 %v240
        %v340 = vunpack.c.h.b16 %v240
        %v341 = vunpack.c.l.b16 %v241
        %v342 = vunpack.c.h.b16 %v241
        %v343 = vunpack.c.l.b16 %v242
        %v344 = vunpack.c.h.b16 %v242
        %v345 = vunpack.c.l.b16 %v243
        %v346 = vunpack.c.h.b16 %v243
        %v347 = vunpack.c.l.b16 %v244
        %v348 = vunpack.c.h.b16 %v244
        %v349 = vunpack.c.l.b16 %v245
        %v350 = vunpack.c.h.b16 %v245
        %v351 = vunpack.c.l.b16 %v246
        %v352 = vunpack.c.h.b16 %v246
        %v353 = vunpack.c.l.b16 %v247
        %v354 = vunpack.c.h.b16 %v247
        %v355 = vunpack.c.l.b16 %v248
        %v356 = vunpack.c.h.b16 %v248
        %v357 = vunpack.c.l.b16 %v249
        %v358 = vunpack.c.h.b16 %v249
        %v359 = vunpack.c.l.b16 %v250
        %v360 = vunpack.c.h.b16 %v250
        %v361 = vunpack.c.l.b16 %v251
        %v362 = vunpack.c.h.b16 %v251
        %v363 = vunpack.c.l.b16 %v252
        %v364 = vunpack.c.h.b16 %v252
        %v365 = vunpack.c.l.b16 %v253
        %v366 = vunpack.c.h.b16 %v253
        %v367 = vunpack.c.l.b16 %v254
        %v368 = vunpack.c.h.b16 %v254
        %v369 = vunpack.c.l.b16 %v255
        %v370 = vunpack.c.h.b16 %v255
        %v371 = vpack.c.b16 %v309, %v307
        %v372 = vpack.c.b16 %v310, %v308
        %v373 = vpack.c.b16 %v313, %v311
        %v374 = vpack.c.b16 %v314, %v312
        %v375 = vpack.c.b16 %v317, %v315
        %v376 = vpack.c.b16 %v318, %v316
        %v377 = vpack.c.b16 %v321, %v319
        %v378 = vpack.c.b16 %v322, %v320
        %v379 = vpack.c.b16 %v325, %v323
        %v380 = vpack.c.b16 %v326, %v324
        %v381 = vpack.c.b16 %v329, %v327
        %v382 = vpack.c.b16 %v330, %v328
        %v383 = vpack.c.b16 %v333, %v331
        %v384 = vpack.c.b16 %v334, %v332
        %v385 = vpack.c.b16 %v337, %v335
        %v386 = vpack.c.b16 %v338, %v336
        %v387 = vpack.c.b16 %v341, %v339
        %v388 = vpack.c.b16 %v342, %v340
        %v389 = vpack.c.b16 %v345, %v343
        %v390 = vpack.c.b16 %v346, %v344
        %v391 = vpack.c.b16 %v349, %v347
        %v392 = vpack.c.b16 %v350, %v348
        %v393 = vpack.c.b16 %v353, %v351
        %v394 = vpack.c.b16 %v354, %v352
        %v395 = vpack.c.b16 %v357, %v355
        %v396 = vpack.c.b16 %v358, %v356
        %v397 = vpack.c.b16 %v361, %v359
        %v398 = vpack.c.b16 %v362, %v360
        %v399 = vpack.c.b16 %v365, %v363
        %v400 = vpack.c.b16 %v366, %v364
        %v401 = vpack.c.b16 %v369, %v367
        %v402 = vpack.c.b16 %v370, %v368
        %435 = vmatprep.subr.bf16.mxu0 %v372
        %436 = vmatpush1.bf16.msra.mxu0 %v371
        %437 = vmatprep.subr.bf16.mxu0 %v374
        %438 = vmatpush1.bf16.msra.mxu0 %v373
        %439 = vmatprep.subr.bf16.mxu0 %v376
        %440 = vmatpush1.bf16.msra.mxu0 %v375
        %441 = vmatprep.subr.bf16.mxu0 %v378
        %442 = vmatpush1.bf16.msra.mxu0 %v377
        %443 = vmatprep.subr.bf16.mxu0 %v380
        %444 = vmatpush1.bf16.msra.mxu0 %v379
        %445 = vmatprep.subr.bf16.mxu0 %v382
        %446 = vmatpush1.bf16.msra.mxu0 %v381
        %447 = vmatprep.subr.bf16.mxu0 %v384
        %448 = vmatpush1.bf16.msra.mxu0 %v383
        %449 = vmatprep.subr.bf16.mxu0 %v386
        %450 = vmatpush1.bf16.msra.mxu0 %v385
        %451 = vmatprep.subr.bf16.mxu0 %v388
        %452 = vmatpush1.bf16.msra.mxu0 %v387
        %453 = vmatprep.subr.bf16.mxu0 %v390
        %454 = vmatpush1.bf16.msra.mxu0 %v389
        %455 = vmatprep.subr.bf16.mxu0 %v392
        %456 = vmatpush1.bf16.msra.mxu0 %v391
        %457 = vmatprep.subr.bf16.mxu0 %v394
        %458 = vmatpush1.bf16.msra.mxu0 %v393
        %459 = vmatprep.subr.bf16.mxu0 %v396
        %460 = vmatpush1.bf16.msra.mxu0 %v395
        %461 = vmatprep.subr.bf16.mxu0 %v398
        %462 = vmatpush1.bf16.msra.mxu0 %v397
        %463 = vmatprep.subr.bf16.mxu0 %v400
        %464 = vmatpush1.bf16.msra.mxu0 %v399
        %465 = vmatprep.subr.bf16.mxu0 %v402
        %466 = vmatpush1.bf16.msra.mxu0 %v401
        %467 = vmatprep.mubr.bf16.mxu0 %v272
        %468 = vmatmul.mubr.bf16.gmra.mrb[0].mxu0 %v271
        %v469 = vpop.f32.mrb[0].mxu0
        %v470 = vadd.f32 %v261, %v469
        %v471 = vpop.f32.mrb[0].mxu0
        %v472 = vadd.f32 %v265, %v471
        %v473 = vpop.f32.mrb[0].mxu0
        %v474 = vpop.f32.mrb[0].mxu0
        %475 = vdwg.mxu0
        %v476 = vmul.f32 %v470, 100.0
        %v477 = vmul.f32 %v472, 100.0
        %v478 = vmin.f32 %v476, 20.0
        %v479 = vmin.f32 %v477, 20.0
        %v480 = vmul.f32 %v478, 1.442695
        %v481 = vpow.pop %v480
        %v482 = vmul.f32 %v479, 1.442695
        %v483 = vpow.pop %v482
        %v484 = vadd.f32 %v481, 1.0
        %v485 = vlog2.pop %v484
        %v486 = vmul.f32 %v485, 0.6931472
        %v487 = vmul.f32 -0.5, %v481
        %v488 = vadd.f32 %v487, 1.0
        %v489 = vmul.f32 %v488, %v481
        %v490 = vand.u32 2147483647, %v481
        %vm491 = vcmp.lt.f32.partialorder %v490, 0.0004427343
        %v492 = vsel %vm491, %v489, %v486
        %v493 = vadd.f32 %v483, 1.0
        %v494 = vlog2.pop %v493
        %v495 = vmul.f32 %v494, 0.6931472
        %v496 = vmul.f32 -0.5, %v483
        %v497 = vadd.f32 %v496, 1.0
        %v498 = vmul.f32 %v497, %v483
        %v499 = vand.u32 2147483647, %v483
        %vm500 = vcmp.lt.f32.partialorder %v499, 0.0004427343
        %v501 = vsel %vm500, %v498, %v495
        %v502 = vmul.f32 %v492, 0.01
        %v503 = vmul.f32 %v501, 0.01
        %vm504 = vcmp.gt.f32.partialorder %v476, 20.0
        %vm505 = vcmp.gt.f32.partialorder %v477, 20.0
        %v506 = vsel %vm504, %v470, %v502
        %v507 = vsel %vm505, %v472, %v503
        %v508 = vpack.c.bf16 %v506, %v506
        %v509 = vpack.c.bf16 %v507, %v507
        %v510 = vld [vmem:[%s3] sm:$0xff]
        %v511 = vld [vmem:[%s3 + $0x8] sm:$0xff]
        %v512 = vld [vmem:[%s3 + $0x10] sm:$0xff]
        %v513 = vld [vmem:[%s3 + $0x18] sm:$0xff]
        %v514 = vld [vmem:[%s3 + $0x20] sm:$0xff]
        %v515 = vld [vmem:[%s3 + $0x28] sm:$0xff]
        %v516 = vld [vmem:[%s3 + $0x30] sm:$0xff]
        %v517 = vld [vmem:[%s3 + $0x38] sm:$0xff]
        %v518 = vld [vmem:[%s3 + $0x40] sm:$0xff]
        %v519 = vld [vmem:[%s3 + $0x48] sm:$0xff]
        %v520 = vld [vmem:[%s3 + $0x50] sm:$0xff]
        %v521 = vld [vmem:[%s3 + $0x58] sm:$0xff]
        %v522 = vld [vmem:[%s3 + $0x60] sm:$0xff]
        %v523 = vld [vmem:[%s3 + $0x68] sm:$0xff]
        %v524 = vld [vmem:[%s3 + $0x70] sm:$0xff]
        %v525 = vld [vmem:[%s3 + $0x78] sm:$0xff]
        %v526 = vld [vmem:[%s3 + $0x80] sm:$0xff]
        %v527 = vld [vmem:[%s3 + $0x88] sm:$0xff]
        %v528 = vld [vmem:[%s3 + $0x90] sm:$0xff]
        %v529 = vld [vmem:[%s3 + $0x98] sm:$0xff]
        %v530 = vld [vmem:[%s3 + $0xa0] sm:$0xff]
        %v531 = vld [vmem:[%s3 + $0xa8] sm:$0xff]
        %v532 = vld [vmem:[%s3 + $0xb0] sm:$0xff]
        %v533 = vld [vmem:[%s3 + $0xb8] sm:$0xff]
        %v534 = vld [vmem:[%s3 + $0xc0] sm:$0xff]
        %v535 = vld [vmem:[%s3 + $0xc8] sm:$0xff]
        %v536 = vld [vmem:[%s3 + $0xd0] sm:$0xff]
        %v537 = vld [vmem:[%s3 + $0xd8] sm:$0xff]
        %v538 = vld [vmem:[%s3 + $0xe0] sm:$0xff]
        %v539 = vld [vmem:[%s3 + $0xe8] sm:$0xff]
        %v540 = vld [vmem:[%s3 + $0xf0] sm:$0xff]
        %v541 = vld [vmem:[%s3 + $0xf8] sm:$0xff]
        %v542 = vld [vmem:[%s4] sm:$0x3]
        %v544 = vlaneseq
        %v545 = vshrl.u32 %v544, 7
        %v546 = vsub.s32 0, %v545
        %v547 = vrot.slane %v542, %v546
        %v548 = vlaneseq
        %v549 = vshrl.u32 %v548, 7
        %v550 = vsub.s32 1, %v549
        %v551 = vrot.slane %v542, %v550
        %v586 = vunpack.c.l.b16 %v510
        %v587 = vunpack.c.h.b16 %v510
        %v588 = vunpack.c.l.b16 %v511
        %v589 = vunpack.c.h.b16 %v511
        %v590 = vunpack.c.l.b16 %v512
        %v591 = vunpack.c.h.b16 %v512
        %v592 = vunpack.c.l.b16 %v513
        %v593 = vunpack.c.h.b16 %v513
        %v594 = vunpack.c.l.b16 %v514
        %v595 = vunpack.c.h.b16 %v514
        %v596 = vunpack.c.l.b16 %v515
        %v597 = vunpack.c.h.b16 %v515
        %v598 = vunpack.c.l.b16 %v516
        %v599 = vunpack.c.h.b16 %v516
        %v600 = vunpack.c.l.b16 %v517
        %v601 = vunpack.c.h.b16 %v517
        %v602 = vunpack.c.l.b16 %v518
        %v603 = vunpack.c.h.b16 %v518
        %v604 = vunpack.c.l.b16 %v519
        %v605 = vunpack.c.h.b16 %v519
        %v606 = vunpack.c.l.b16 %v520
        %v607 = vunpack.c.h.b16 %v520
        %v608 = vunpack.c.l.b16 %v521
        %v609 = vunpack.c.h.b16 %v521
        %v610 = vunpack.c.l.b16 %v522
        %v611 = vunpack.c.h.b16 %v522
        %v612 = vunpack.c.l.b16 %v523
        %v613 = vunpack.c.h.b16 %v523
        %v614 = vunpack.c.l.b16 %v524
        %v615 = vunpack.c.h.b16 %v524
        %v616 = vunpack.c.l.b16 %v525
        %v617 = vunpack.c.h.b16 %v525
        %v618 = vunpack.c.l.b16 %v526
        %v619 = vunpack.c.h.b16 %v526
        %v620 = vunpack.c.l.b16 %v527
        %v621 = vunpack.c.h.b16 %v527
        %v622 = vunpack.c.l.b16 %v528
        %v623 = vunpack.c.h.b16 %v528
        %v624 = vunpack.c.l.b16 %v529
        %v625 = vunpack.c.h.b16 %v529
        %v626 = vunpack.c.l.b16 %v530
        %v627 = vunpack.c.h.b16 %v530
        %v628 = vunpack.c.l.b16 %v531
        %v629 = vunpack.c.h.b16 %v531
        %v630 = vunpack.c.l.b16 %v532
        %v631 = vunpack.c.h.b16 %v532
        %v632 = vunpack.c.l.b16 %v533
        %v633 = vunpack.c.h.b16 %v533
        %v634 = vunpack.c.l.b16 %v534
        %v635 = vunpack.c.h.b16 %v534
        %v636 = vunpack.c.l.b16 %v535
        %v637 = vunpack.c.h.b16 %v535
        %v638 = vunpack.c.l.b16 %v536
        %v639 = vunpack.c.h.b16 %v536
        %v640 = vunpack.c.l.b16 %v537
        %v641 = vunpack.c.h.b16 %v537
        %v642 = vunpack.c.l.b16 %v538
        %v643 = vunpack.c.h.b16 %v538
        %v644 = vunpack.c.l.b16 %v539
        %v645 = vunpack.c.h.b16 %v539
        %v646 = vunpack.c.l.b16 %v540
        %v647 = vunpack.c.h.b16 %v540
        %v648 = vunpack.c.l.b16 %v541
        %v649 = vunpack.c.h.b16 %v541
        %v650 = vpack.c.b16 %v588, %v586
        %v651 = vpack.c.b16 %v589, %v587
        %v652 = vpack.c.b16 %v592, %v590
        %v653 = vpack.c.b16 %v593, %v591
        %v654 = vpack.c.b16 %v596, %v594
        %v655 = vpack.c.b16 %v597, %v595
        %v656 = vpack.c.b16 %v600, %v598
        %v657 = vpack.c.b16 %v601, %v599
        %v658 = vpack.c.b16 %v604, %v602
        %v659 = vpack.c.b16 %v605, %v603
        %v660 = vpack.c.b16 %v608, %v606
        %v661 = vpack.c.b16 %v609, %v607
        %v662 = vpack.c.b16 %v612, %v610
        %v663 = vpack.c.b16 %v613, %v611
        %v664 = vpack.c.b16 %v616, %v614
        %v665 = vpack.c.b16 %v617, %v615
        %v666 = vpack.c.b16 %v620, %v618
        %v667 = vpack.c.b16 %v621, %v619
        %v668 = vpack.c.b16 %v624, %v622
        %v669 = vpack.c.b16 %v625, %v623
        %v670 = vpack.c.b16 %v628, %v626
        %v671 = vpack.c.b16 %v629, %v627
        %v672 = vpack.c.b16 %v632, %v630
        %v673 = vpack.c.b16 %v633, %v631
        %v674 = vpack.c.b16 %v636, %v634
        %v675 = vpack.c.b16 %v637, %v635
        %v676 = vpack.c.b16 %v640, %v638
        %v677 = vpack.c.b16 %v641, %v639
        %v678 = vpack.c.b16 %v644, %v642
        %v679 = vpack.c.b16 %v645, %v643
        %v680 = vpack.c.b16 %v648, %v646
        %v681 = vpack.c.b16 %v649, %v647
        %714 = vmatprep.subr.bf16.mxu0 %v651
        %715 = vmatpush1.bf16.msra.mxu0 %v650
        %716 = vmatprep.subr.bf16.mxu0 %v653
        %717 = vmatpush1.bf16.msra.mxu0 %v652
        %718 = vmatprep.subr.bf16.mxu0 %v655
        %719 = vmatpush1.bf16.msra.mxu0 %v654
        %720 = vmatprep.subr.bf16.mxu0 %v657
        %721 = vmatpush1.bf16.msra.mxu0 %v656
        %722 = vmatprep.subr.bf16.mxu0 %v659
        %723 = vmatpush1.bf16.msra.mxu0 %v658
        %724 = vmatprep.subr.bf16.mxu0 %v661
        %725 = vmatpush1.bf16.msra.mxu0 %v660
        %726 = vmatprep.subr.bf16.mxu0 %v663
        %727 = vmatpush1.bf16.msra.mxu0 %v662
        %728 = vmatprep.subr.bf16.mxu0 %v665
        %729 = vmatpush1.bf16.msra.mxu0 %v664
        %730 = vmatprep.subr.bf16.mxu0 %v667
        %731 = vmatpush1.bf16.msra.mxu0 %v666
        %732 = vmatprep.subr.bf16.mxu0 %v669
        %733 = vmatpush1.bf16.msra.mxu0 %v668
        %734 = vmatprep.subr.bf16.mxu0 %v671
        %735 = vmatpush1.bf16.msra.mxu0 %v670
        %736 = vmatprep.subr.bf16.mxu0 %v673
        %737 = vmatpush1.bf16.msra.mxu0 %v672
        %738 = vmatprep.subr.bf16.mxu0 %v675
        %739 = vmatpush1.bf16.msra.mxu0 %v674
        %740 = vmatprep.subr.bf16.mxu0 %v677
        %741 = vmatpush1.bf16.msra.mxu0 %v676
        %742 = vmatprep.subr.bf16.mxu0 %v679
        %743 = vmatpush1.bf16.msra.mxu0 %v678
        %744 = vmatprep.subr.bf16.mxu0 %v681
        %745 = vmatpush1.bf16.msra.mxu0 %v680
        %746 = vmatprep.mubr.bf16.mxu0 %v509
        %747 = vmatmul.mubr.bf16.gmra.mrb[0].mxu0 %v508
        %v748 = vpop.f32.mrb[0].mxu0
        %v749 = vadd.f32 %v547, %v748
        %v750 = vpop.f32.mrb[0].mxu0
        %v751 = vadd.f32 %v551, %v750
        %v752 = vpop.f32.mrb[0].mxu0
        %v753 = vpop.f32.mrb[0].mxu0
        %754 = vdwg.mxu0
        %755 = vst [vmem:[%s217] sm:$0xff] %v749
        %756 = vst [vmem:[%s217 + $0x8] sm:$0xff] %v751
        %s757 = sand.u32 %s137, 1
        %s758 = scalar_lea.sflag [#allocation3], %s757
        %s759 = sand.u32 %s137, 1
        %s760 = smul.addr %s759, 16
        %s761 = scalar_lea.vmem [#allocation2], %s760
        // Predicated region
        $region41: #{_lambda_.1} parent=39 // pred_check
          %p762 = pneg %p147
        $region42: #{_lambda_.1} parent=39 // pred_check_branch
          %764 = sbr.rel (%p762) target = $region44
        $region43: #{_lambda_.1} parent=39 // pred_region
          %s766 = ssub.s32 256, 256
          %767 = vsyncadd %s758, %s766
          %s768 = smul.addr %s19, 2
          %s769 = smul.addr %s768, 128
          %s770 = scalar_lea.hbm %s5, %s769
          %s772 = sshll.u32 %s761, 4
          %s773 = int_to_ptr.vmem [resolvable:$true] %s772
          %775 = dma.vmem_to_hbm [thread:$0]  %s773, 256, %s770, %s758
        $region44: #{_lambda_.1} parent=39 // pred_fallthru
          _
      $region40: #{_lambda_.1} parent=5 // pred_fallthru
        _
      %p776 = scmp.le.s32.totalorder 2, %s14
      // Predicated region
      $region45: #{_lambda_.1} parent=5 // pred_check
        %p777 = pneg %p776
      $region46: #{_lambda_.1} parent=5 // pred_check_branch
        %779 = sbr.rel (%p777) target = $region48
      $region47: #{_lambda_.1} parent=5 // pred_region
        %s780 = ssub.s32 %s14, 2
        // Predicated region
        $region49: #{_lambda_.1} parent=47 // pred_check
          %p781 = pneg %p153
        $region50: #{_lambda_.1} parent=47 // pred_check_branch
          %783 = sbr.rel (%p781) target = $region52
        $region51: #{_lambda_.1} parent=47 // pred_region
          %s784 = sand.u32 %s138, 1
          %s785 = scalar_lea.sflag [#allocation3], %s784
          %s786 = sand.u32 %s138, 1
          %s787 = smul.addr %s786, 16
          %s788 = scalar_lea.vmem [#allocation2], %s787
          %789 = dma.done %s785, 256
        $region52: #{_lambda_.1} parent=47 // pred_fallthru
          _
      $region48: #{_lambda_.1} parent=5 // pred_fallthru
        _
    $region6: #{_lambda_.1} parent=1 // loop_footer
      %s18 = sadd.s32 1, %s14
    $region7: #{_lambda_.1} parent=1 // loop_footer_branch
      %13 = sbr.rel target = $region3
    $region8: #{_lambda_.1} parent=1 // loop_exit
      _
    %790 = vsyncpa [#allocation3], 1
    %s791 = scalar_lea.sflag [#allocation3], 1
    %792 = vsyncpa %s791, 1

</llo_original>
